<compile_context>
chip_gen: v7x
topology: tpu7x:2x2x1
jax: 0.10.0
libtpu: 0.0.40
codegen_flags: <defaults>
</compile_context>

<pallas_src>
import functools

import jax
import jax.numpy as jnp
from jax.experimental import pallas as pl
from jax.experimental.pallas import tpu as pltpu


def _round_up(n: int, m: int) -> int:
    return ((n + m - 1) // m) * m


def _sublane_multiple(dtype) -> int:
    # bf16/f16 pack 2 rows per sublane -> min sublane tile 16; f32 -> 8.
    return 16 if jnp.dtype(dtype).itemsize == 2 else 8


def _fused_mlp_kernel(*refs, num_layers: int):
    # refs = (x_ref, w0_ref, b0_ref, w1_ref, b1_ref, ..., o_ref)
    #   x_ref : (TB, D0_pad)        compute dtype (bf16 or f32)
    #   wi_ref: (Din_pad, Dout_pad) compute dtype, pre-transposed, zero padded
    #   bi_ref: (1, Dout_pad)       f32
    #   o_ref : (TB, Dlast_pad)     output dtype
    x_ref = refs[0]
    o_ref = refs[-1]
    layer_refs = refs[1:-1]

    h = x_ref[...]
    for i in range(num_layers):
        w = layer_refs[2 * i][...]
        b = layer_refs[2 * i + 1][...]
        # MXU matmul with f32 accumulation; bias add (+ ReLU) in f32.
        acc = jnp.dot(h, w, preferred_element_type=jnp.float32)
        acc = acc + b.astype(jnp.float32)
        if i < num_layers - 1:
            acc = jnp.maximum(acc, 0.0)          # ReLU between hidden layers
            h = acc.astype(w.dtype)              # back to compute dtype
        else:
            o_ref[...] = acc.astype(o_ref.dtype)  # lane-dense, unmasked store


def init_mlp_params(sizes, key):
    """Deterministic PyTorch-style init for nn.Linear (W: (out,in), b: (out,))."""
    params = []
    for i in range(len(sizes) - 1):
        fan_in, fan_out = sizes[i], sizes[i + 1]
        key, kw, kb = jax.random.split(key, 3)
        bound = 1.0 / jnp.sqrt(jnp.float32(fan_in))
        w = jax.random.uniform(kw, (fan_out, fan_in), jnp.float32, -bound, bound)
        b = jax.random.uniform(kb, (fan_out,), jnp.float32, -bound, bound)
        params.append((w, b))
    return params


def prepare_mlp_params(params, compute_dtype=jnp.bfloat16):
    """One-time: pad feature dims to 128-multiples, pre-transpose, cast.

    Zero padding is exact: padded input columns hit zero weight rows, padded
    output columns get zero weights + zero bias, so real outputs are unchanged
    and the extra columns stay zero through every layer.  Biases stay f32
    (the bias add is done in f32 inside the kernel).
    """
    prepared = []
    for w, b in params:
        dout, din = w.shape
        din_p, dout_p = _round_up(din, 128), _round_up(dout, 128)
        wt = (jnp.zeros((din_p, dout_p), compute_dtype)
              .at[:din, :dout].set(w.T.astype(compute_dtype)))
        bp = (jnp.zeros((1, dout_p), jnp.float32)
              .at[0, :dout].set(b.astype(jnp.float32)))
        prepared.append((wt, bp))
    return prepared


@functools.partial(jax.jit, static_argnums=(2, 3))
def mlp_forward_pallas(prepared, x, out_dim, max_tb=256):
    """Fused MLP forward: one pallas_call, batch-tiled grid, resident weights."""
    num_layers = len(prepared)
    compute_dtype = prepared[0][0].dtype
    itemsize = jnp.dtype(compute_dtype).itemsize
    B, d0 = x.shape
    d0_pad = prepared[0][0].shape[0]
    dlast_pad = prepared[-1][0].shape[1]

    # Batch tile: multiple-of-256 preferred (fills the 256-row MXU on v6e/v7x)
    # but never larger than the padded batch; sublane rounding depends on dtype.
    sub = _sublane_multiple(compute_dtype)
    B_pad = _round_up(B, sub)
    tb = min(max(_round_up(max_tb, sub), sub), B_pad)
    B_pad = _round_up(B_pad, tb)
    grid = (B_pad // tb,)

    # Pad / cast x only when actually needed (static check) to avoid an extra
    # HBM round-trip for already-aligned inputs.
    if (B, d0) == (B_pad, d0_pad) and x.dtype == compute_dtype:
        x_in = x
    else:
        x_in = (jnp.zeros((B_pad, d0_pad), compute_dtype)
                .at[:B, :d0].set(x.astype(compute_dtype)))

    flat_args = []
    in_specs = [pl.BlockSpec((tb, d0_pad), lambda i: (i, 0))]   # batch-tiled
    weight_bytes = 0
    for wt, bp in prepared:
        flat_args.extend((wt, bp))
        # Constant block index -> weights/biases are VMEM-resident across tiles.
        in_specs.append(pl.BlockSpec(wt.shape, lambda i: (0, 0)))
        in_specs.append(pl.BlockSpec(bp.shape, lambda i: (0, 0)))
        weight_bytes += wt.size * wt.dtype.itemsize + bp.size * bp.dtype.itemsize

    # --- explicit VMEM budget ---------------------------------------------
    # resident weights + double-buffered x/out tiles + f32 intermediates,
    # with headroom; clamp to the device's physical VMEM (64 MiB on v7x,
    # 128 MiB on v5e/v6e) minus a safety margin.
    max_feat = max([d0_pad] + [w.shape[1] for w, _ in prepared])
    out_itemsize = jnp.dtype(x.dtype).itemsize
    act_bytes = 2 * tb * (d0_pad * itemsize + dlast_pad * out_itemsize)
    interm_bytes = 2 * tb * max_feat * 4
    vmem_bytes = int(1.5 * (weight_bytes + act_bytes + interm_bytes)) + (4 << 20)
    vmem_bytes = max(vmem_bytes, 32 << 20)
    try:
        phys_vmem = int(pltpu.get_tpu_info().vmem_capacity_bytes)
    except Exception:
        phys_vmem = 64 << 20
    vmem_bytes = min(vmem_bytes, max(phys_vmem - (8 << 20), 32 << 20))

    flops = 2 * B_pad * sum(w.shape[0] * w.shape[1] for w, _ in prepared)
    bytes_accessed = (weight_bytes
                      + B_pad * d0_pad * itemsize
                      + B_pad * dlast_pad * out_itemsize)

    kernel = functools.partial(_fused_mlp_kernel, num_layers=num_layers)
    out_pad = pl.pallas_call(
        kernel,
        out_shape=jax.ShapeDtypeStruct((B_pad, dlast_pad), x.dtype),
        grid=grid,
        in_specs=in_specs,
        out_specs=pl.BlockSpec((tb, dlast_pad), lambda i: (i, 0)),
        compiler_params=pltpu.CompilerParams(
            dimension_semantics=("parallel",),   # megacore batch split on v7x
            vmem_limit_bytes=vmem_bytes),
        cost_estimate=pl.CostEstimate(
            flops=flops, transcendentals=0, bytes_accessed=bytes_accessed),
    )(x_in, *flat_args)

    if (B_pad, dlast_pad) == (B, out_dim):
        return out_pad
    return out_pad[:B, :out_dim]


def mlp_reference(params, x):
    n = len(params)
    for i, (w, b) in enumerate(params):
        x = x @ w.T + b
        if i < n - 1:
            x = jnp.maximum(x, 0.0)
    return x


if __name__ == "__main__":
    sizes = [32, 64, 48, 10]  # MLP(sizes): 3 Linear layers, ReLU after first 2

    key = jax.random.PRNGKey(0)
    params = init_mlp_params(sizes, key)

    # --- case 1: small batch, f32 compute (tight tolerance) ----------------
    batch = 2
    key, kx = jax.random.split(key)
    x = jax.random.normal(kx, (batch, sizes[0]), jnp.float32)
    ref = mlp_reference(params, x)

    prepared_f32 = prepare_mlp_params(params, compute_dtype=jnp.float32)
    out_f32 = jax.block_until_ready(mlp_forward_pallas(prepared_f32, x, sizes[-1]))
    assert out_f32.shape == (batch, sizes[-1])
    assert jnp.allclose(out_f32, ref, atol=1e-4, rtol=1e-4), (
        f"f32 max abs err = {jnp.max(jnp.abs(out_f32 - ref))}")

    # --- case 2: same inputs, bf16 compute (looser tolerance) --------------
    prepared_bf16 = prepare_mlp_params(params, compute_dtype=jnp.bfloat16)
    out_bf16 = jax.block_until_ready(mlp_forward_pallas(prepared_bf16, x, sizes[-1]))
    assert out_bf16.shape == (batch, sizes[-1])
    assert jnp.allclose(out_bf16, ref, atol=5e-2, rtol=5e-2), (
        f"bf16 max abs err = {jnp.max(jnp.abs(out_bf16 - ref))}")

    # --- case 3: multi-tile batch grid (exercise pipelining path, f32) -----
    batch2 = 32
    key, kx2 = jax.random.split(key)
    x2 = jax.random.normal(kx2, (batch2, sizes[0]), jnp.float32)
    ref2 = mlp_reference(params, x2)
    out2 = jax.block_until_ready(
        mlp_forward_pallas(prepared_f32, x2, sizes[-1], 8))  # tb=8 -> grid=(4,)
    assert out2.shape == (batch2, sizes[-1])
    assert jnp.allclose(out2, ref2, atol=1e-4, rtol=1e-4), (
        f"grid max abs err = {jnp.max(jnp.abs(out2 - ref2))}")

    print("KERNEL_OK")
</pallas_src>

<mosaic_0001>
module attributes {stable_mosaic.version = 11 : i64} {
  func.func @_fused_mlp_kernel(%arg0: i32, %arg1: memref<8x128xf32, #tpu.memory_space<vmem>>, %arg2: memref<128x128xf32, #tpu.memory_space<vmem>>, %arg3: memref<1x128xf32, #tpu.memory_space<vmem>>, %arg4: memref<128x128xf32, #tpu.memory_space<vmem>>, %arg5: memref<1x128xf32, #tpu.memory_space<vmem>>, %arg6: memref<128x128xf32, #tpu.memory_space<vmem>>, %arg7: memref<1x128xf32, #tpu.memory_space<vmem>>, %arg8: memref<8x128xf32, #tpu.memory_space<vmem>>) attributes {dimension_semantics = [#tpu.dimension_semantics<parallel>], iteration_bounds = array<i64: 1>, scalar_prefetch = 0 : i64, scratch_operands = 0 : i64, tpu.core_type = #tpu.core_type<tc>, window_params = [{transform_indices = @transform_0, window_bounds = array<i64: 8, 128>}, {pipeline_mode = #tpu.pipeline_mode<synchronous>, transform_indices = @transform_1, window_bounds = array<i64: 128, 128>}, {pipeline_mode = #tpu.pipeline_mode<synchronous>, transform_indices = @transform_2, window_bounds = array<i64: 1, 128>}, {pipeline_mode = #tpu.pipeline_mode<synchronous>, transform_indices = @transform_3, window_bounds = array<i64: 128, 128>}, {pipeline_mode = #tpu.pipeline_mode<synchronous>, transform_indices = @transform_4, window_bounds = array<i64: 1, 128>}, {pipeline_mode = #tpu.pipeline_mode<synchronous>, transform_indices = @transform_5, window_bounds = array<i64: 128, 128>}, {pipeline_mode = #tpu.pipeline_mode<synchronous>, transform_indices = @transform_6, window_bounds = array<i64: 1, 128>}, {transform_indices = @transform_7, window_bounds = array<i64: 8, 128>}]} {
    %c0 = arith.constant 0 : index
    %c0_0 = arith.constant 0 : index
    %0 = vector.load %arg1[%c0, %c0_0] : memref<8x128xf32, #tpu.memory_space<vmem>>, vector<8x128xf32>
    %c0_1 = arith.constant 0 : index
    %c0_2 = arith.constant 0 : index
    %1 = vector.load %arg2[%c0_1, %c0_2] : memref<128x128xf32, #tpu.memory_space<vmem>>, vector<128x128xf32>
    %c0_3 = arith.constant 0 : index
    %c0_4 = arith.constant 0 : index
    %2 = vector.load %arg3[%c0_3, %c0_4] : memref<1x128xf32, #tpu.memory_space<vmem>>, vector<1x128xf32>
    %cst = arith.constant dense<0.000000e+00> : vector<8x128xf32>
    %3 = tpu.matmul %0, %1, %cst {dimension_numbers = #tpu.dot_dimension_numbers<[1], [0], [0], [1], [0, 0, 1, 1], [], []>} : vector<8x128xf32>, vector<128x128xf32>, vector<8x128xf32> -> vector<8x128xf32>
    %4 = vector.broadcast %2 : vector<1x128xf32> to vector<8x128xf32>
    %5 = arith.addf %3, %4 : vector<8x128xf32>
    %cst_5 = arith.constant 0.000000e+00 : f32
    %6 = vector.broadcast %cst_5 : f32 to vector<8x128xf32>
    %7 = arith.maximumf %5, %6 : vector<8x128xf32>
    %c0_6 = arith.constant 0 : index
    %c0_7 = arith.constant 0 : index
    %8 = vector.load %arg4[%c0_6, %c0_7] : memref<128x128xf32, #tpu.memory_space<vmem>>, vector<128x128xf32>
    %c0_8 = arith.constant 0 : index
    %c0_9 = arith.constant 0 : index
    %9 = vector.load %arg5[%c0_8, %c0_9] : memref<1x128xf32, #tpu.memory_space<vmem>>, vector<1x128xf32>
    %cst_10 = arith.constant dense<0.000000e+00> : vector<8x128xf32>
    %10 = tpu.matmul %7, %8, %cst_10 {dimension_numbers = #tpu.dot_dimension_numbers<[1], [0], [0], [1], [0, 0, 1, 1], [], []>} : vector<8x128xf32>, vector<128x128xf32>, vector<8x128xf32> -> vector<8x128xf32>
    %11 = vector.broadcast %9 : vector<1x128xf32> to vector<8x128xf32>
    %12 = arith.addf %10, %11 : vector<8x128xf32>
    %cst_11 = arith.constant 0.000000e+00 : f32
    %13 = vector.broadcast %cst_11 : f32 to vector<8x128xf32>
    %14 = arith.maximumf %12, %13 : vector<8x128xf32>
    %c0_12 = arith.constant 0 : index
    %c0_13 = arith.constant 0 : index
    %15 = vector.load %arg6[%c0_12, %c0_13] : memref<128x128xf32, #tpu.memory_space<vmem>>, vector<128x128xf32>
    %c0_14 = arith.constant 0 : index
    %c0_15 = arith.constant 0 : index
    %16 = vector.load %arg7[%c0_14, %c0_15] : memref<1x128xf32, #tpu.memory_space<vmem>>, vector<1x128xf32>
    %cst_16 = arith.constant dense<0.000000e+00> : vector<8x128xf32>
    %17 = tpu.matmul %14, %15, %cst_16 {dimension_numbers = #tpu.dot_dimension_numbers<[1], [0], [0], [1], [0, 0, 1, 1], [], []>} : vector<8x128xf32>, vector<128x128xf32>, vector<8x128xf32> -> vector<8x128xf32>
    %18 = vector.broadcast %16 : vector<1x128xf32> to vector<8x128xf32>
    %19 = arith.addf %17, %18 : vector<8x128xf32>
    %c0_17 = arith.constant 0 : index
    %c0_18 = arith.constant 0 : index
    %20 = vector.load %arg8[%c0_17, %c0_18] : memref<8x128xf32, #tpu.memory_space<vmem>>, vector<8x128xf32>
    tpu.vector_store %arg8[%c0_17, %c0_18], %19 {strides = array<i32>} : memref<8x128xf32, #tpu.memory_space<vmem>>, vector<8x128xf32>,
    return
  }
  func.func @transform_0(%arg0: i32) -> (i32, i32) {
    %c0_i32 = arith.constant 0 : i32
    %c0_i32_0 = arith.constant 0 : i32
    return %arg0, %c0_i32 : i32, i32
  }
  func.func @transform_1(%arg0: i32) -> (i32, i32) {
    %c0_i32 = arith.constant 0 : i32
    %c0_i32_0 = arith.constant 0 : i32
    %c0_i32_1 = arith.constant 0 : i32
    return %c0_i32, %c0_i32_0 : i32, i32
  }
  func.func @transform_2(%arg0: i32) -> (i32, i32) {
    %c0_i32 = arith.constant 0 : i32
    %c0_i32_0 = arith.constant 0 : i32
    %c0_i32_1 = arith.constant 0 : i32
    return %c0_i32, %c0_i32_0 : i32, i32
  }
  func.func @transform_3(%arg0: i32) -> (i32, i32) {
    %c0_i32 = arith.constant 0 : i32
    %c0_i32_0 = arith.constant 0 : i32
    %c0_i32_1 = arith.constant 0 : i32
    return %c0_i32, %c0_i32_0 : i32, i32
  }
  func.func @transform_4(%arg0: i32) -> (i32, i32) {
    %c0_i32 = arith.constant 0 : i32
    %c0_i32_0 = arith.constant 0 : i32
    %c0_i32_1 = arith.constant 0 : i32
    return %c0_i32, %c0_i32_0 : i32, i32
  }
  func.func @transform_5(%arg0: i32) -> (i32, i32) {
    %c0_i32 = arith.constant 0 : i32
    %c0_i32_0 = arith.constant 0 : i32
    %c0_i32_1 = arith.constant 0 : i32
    return %c0_i32, %c0_i32_0 : i32, i32
  }
  func.func @transform_6(%arg0: i32) -> (i32, i32) {
    %c0_i32 = arith.constant 0 : i32
    %c0_i32_0 = arith.constant 0 : i32
    %c0_i32_1 = arith.constant 0 : i32
    return %c0_i32, %c0_i32_0 : i32, i32
  }
  func.func @transform_7(%arg0: i32) -> (i32, i32) {
    %c0_i32 = arith.constant 0 : i32
    %c0_i32_0 = arith.constant 0 : i32
    return %arg0, %c0_i32 : i32, i32
  }
}

</mosaic_0001>

<llo_original>
// kernel: mlp_forward_pallas.1
$region0: #{mlp_forward_pallas.1}
  #allocation0 [shape = 'u32[]', space=smem, size = 0x4, offset = 0x4, fixed_abs, tag = 'smem constant byte address 0x4 - core index']
  #allocation1 [shape = 'u32[144,128]{1,0:T(1,128)}', space=vmem, size = 0x12000, scoped, tag = 'internal scratch']
  %s0 = inlined_call_operand.vmem [shape: f32[8,128], index: 0, kind: input, shape index: {}]
  %s1 = inlined_call_operand.hbm [shape: f32[128,128], index: 1, kind: input, shape index: {}]
  %s2 = inlined_call_operand.vmem [shape: f32[1,128], index: 2, kind: input, shape index: {}]
  %s3 = inlined_call_operand.hbm [shape: f32[128,128], index: 3, kind: input, shape index: {}]
  %s4 = inlined_call_operand.vmem [shape: f32[1,128], index: 4, kind: input, shape index: {}]
  %s5 = inlined_call_operand.hbm [shape: f32[128,128], index: 5, kind: input, shape index: {}]
  %s6 = inlined_call_operand.vmem [shape: f32[1,128], index: 6, kind: input, shape index: {}]
  %s7 = inlined_call_operand.vmem [shape: f32[8,128], index: 7, kind: output, shape index: {}]
  %s8 = sld [smem:[#allocation0]]
  $region50: #{mlp_forward_pallas.1} parent=0
    _
  %s10 = ssub.s32 1, %s8
  %s11 = scalar_select 0, %s10, %s8
  $region1: #{mlp_forward_pallas.1} parent=0
    #allocation2 [shape = 'u8[65536]{0}', space=vmem, size = 0x10000, scoped, tag = 'input window, operand 1, single buffered']
    #allocation3 [shape = 's32[1]{0}', space=sflag, size = 0x4, scoped, tag = 'scoped memory for mlp_forward_pallas.1']
    #allocation4 [shape = 'u8[65536]{0}', space=vmem, size = 0x10000, scoped, tag = 'input window, operand 3, single buffered']
    #allocation5 [shape = 's32[1]{0}', space=sflag, size = 0x4, scoped, tag = 'scoped memory for mlp_forward_pallas.1']
    #allocation6 [shape = 'u8[65536]{0}', space=vmem, size = 0x10000, scoped, tag = 'input window, operand 5, single buffered']
    %12 = vsyncpa [#allocation3], 0
    %13 = vsyncpa [#allocation5], 0
    // Predicated region
    $region2: #{mlp_forward_pallas.1} parent=1 // pred_check
      _
    $region3: #{mlp_forward_pallas.1} parent=1 // pred_check_branch
      %15 = sbr.rel (0) target = $region5
    $region4: #{mlp_forward_pallas.1} parent=1 // pred_region
      _
    $region5: #{mlp_forward_pallas.1} parent=1 // pred_fallthru
      _
    // Predicated region
    $region6: #{mlp_forward_pallas.1} parent=1 // pred_check
      _
    $region7: #{mlp_forward_pallas.1} parent=1 // pred_check_branch
      %17 = sbr.rel (0) target = $region9
    $region8: #{mlp_forward_pallas.1} parent=1 // pred_region
      %s19 = ssub.s32 2048, 2048
      %20 = vsyncadd [#allocation3], %s19
      %s21 = sshll.u32 [#allocation2], 4
      %s22 = int_to_ptr.vmem [resolvable:$true] %s21
      %27 = dma.hbm_to_vmem [thread:$0]  %s1, 2048, %s22, [#allocation3], 128, 128, 8
    $region9: #{mlp_forward_pallas.1} parent=1 // pred_fallthru
      _
    // Predicated region
    $region10: #{mlp_forward_pallas.1} parent=1 // pred_check
      _
    $region11: #{mlp_forward_pallas.1} parent=1 // pred_check_branch
      %29 = sbr.rel (0) target = $region13
    $region12: #{mlp_forward_pallas.1} parent=1 // pred_region
      _
    $region13: #{mlp_forward_pallas.1} parent=1 // pred_fallthru
      _
    // Predicated region
    $region14: #{mlp_forward_pallas.1} parent=1 // pred_check
      _
    $region15: #{mlp_forward_pallas.1} parent=1 // pred_check_branch
      %31 = sbr.rel (0) target = $region17
    $region16: #{mlp_forward_pallas.1} parent=1 // pred_region
      %s33 = ssub.s32 2048, 2048
      %34 = vsyncadd [#allocation5], %s33
      %s35 = sshll.u32 [#allocation4], 4
      %s36 = int_to_ptr.vmem [resolvable:$true] %s35
      %41 = dma.hbm_to_vmem [thread:$0]  %s3, 2048, %s36, [#allocation5], 128, 128, 8
    $region17: #{mlp_forward_pallas.1} parent=1 // pred_fallthru
      _
    // Predicated region
    $region18: #{mlp_forward_pallas.1} parent=1 // pred_check
      _
    $region19: #{mlp_forward_pallas.1} parent=1 // pred_check_branch
      %43 = sbr.rel (0) target = $region21
    $region20: #{mlp_forward_pallas.1} parent=1 // pred_region
      _
    $region21: #{mlp_forward_pallas.1} parent=1 // pred_fallthru
      _
    // Predicated region
    $region22: #{mlp_forward_pallas.1} parent=1 // pred_check
      _
    $region23: #{mlp_forward_pallas.1} parent=1 // pred_check_branch
      %45 = sbr.rel (0) target = $region25
    $region24: #{mlp_forward_pallas.1} parent=1 // pred_region
      %s47 = ssub.s32 2048, 2048
      %48 = vsyncadd [#allocation5], %s47
      %s49 = sshll.u32 [#allocation6], 4
      %s50 = int_to_ptr.vmem [resolvable:$true] %s49
      %55 = dma.hbm_to_vmem [thread:$0]  %s5, 2048, %s50, [#allocation5], 128, 128, 8
    $region25: #{mlp_forward_pallas.1} parent=1 // pred_fallthru
      _
    // Predicated region
    $region26: #{mlp_forward_pallas.1} parent=1 // pred_check
      _
    $region27: #{mlp_forward_pallas.1} parent=1 // pred_check_branch
      %57 = sbr.rel (0) target = $region29
    $region28: #{mlp_forward_pallas.1} parent=1 // pred_region
      _
    $region29: #{mlp_forward_pallas.1} parent=1 // pred_fallthru
      _
    // Predicated region
    $region30: #{mlp_forward_pallas.1} parent=1 // pred_check
      _
    $region31: #{mlp_forward_pallas.1} parent=1 // pred_check_branch
      %59 = sbr.rel (0) target = $region33
    $region32: #{mlp_forward_pallas.1} parent=1 // pred_region
      %60 = dma.done [#allocation3], 2048
    $region33: #{mlp_forward_pallas.1} parent=1 // pred_fallthru
      _
    // Predicated region
    $region34: #{mlp_forward_pallas.1} parent=1 // pred_check
      _
    $region35: #{mlp_forward_pallas.1} parent=1 // pred_check_branch
      %62 = sbr.rel (0) target = $region37
    $region36: #{mlp_forward_pallas.1} parent=1 // pred_region
      %63 = dma.done [#allocation5], 2048
    $region37: #{mlp_forward_pallas.1} parent=1 // pred_fallthru
      _
    // Predicated region
    $region38: #{mlp_forward_pallas.1} parent=1 // pred_check
      _
    $region39: #{mlp_forward_pallas.1} parent=1 // pred_check_branch
      %65 = sbr.rel (0) target = $region41
    $region40: #{mlp_forward_pallas.1} parent=1 // pred_region
      %66 = dma.done [#allocation5], 2048
    $region41: #{mlp_forward_pallas.1} parent=1 // pred_fallthru
      _
    %v67 = vld [vmem:[%s0] sm:$0xff]
    %v68 = vld [vmem:[#allocation2] sm:$0xff]
    %v69 = vld [vmem:[#allocation2 + $0x8] sm:$0xff]
    %v70 = vld [vmem:[#allocation2 + $0x10] sm:$0xff]
    %v71 = vld [vmem:[#allocation2 + $0x18] sm:$0xff]
    %v72 = vld [vmem:[#allocation2 + $0x20] sm:$0xff]
    %v73 = vld [vmem:[#allocation2 + $0x28] sm:$0xff]
    %v74 = vld [vmem:[#allocation2 + $0x30] sm:$0xff]
    %v75 = vld [vmem:[#allocation2 + $0x38] sm:$0xff]
    %v76 = vld [vmem:[#allocation2 + $0x40] sm:$0xff]
    %v77 = vld [vmem:[#allocation2 + $0x48] sm:$0xff]
    %v78 = vld [vmem:[#allocation2 + $0x50] sm:$0xff]
    %v79 = vld [vmem:[#allocation2 + $0x58] sm:$0xff]
    %v80 = vld [vmem:[#allocation2 + $0x60] sm:$0xff]
    %v81 = vld [vmem:[#allocation2 + $0x68] sm:$0xff]
    %v82 = vld [vmem:[#allocation2 + $0x70] sm:$0xff]
    %v83 = vld [vmem:[#allocation2 + $0x78] sm:$0xff]
    %v84 = vld [vmem:[%s2] sm:$0x1]
    %v86 = vlaneseq
    %v87 = vshrl.u32 %v86, 7
    %v88 = vsub.s32 0, %v87
    %v89 = vrot.slane %v84, %v88
    %91 = vmatprep.subr.mxu0 0.0
    %92 = vmatpush1.msra.mxu0 %v68
    %93 = vmatprep.subr.mxu0 0.0
    %94 = vmatpush1.msra.mxu0 %v69
    %95 = vmatprep.subr.mxu0 0.0
    %96 = vmatpush1.msra.mxu0 %v70
    %97 = vmatprep.subr.mxu0 0.0
    %98 = vmatpush1.msra.mxu0 %v71
    %99 = vmatprep.subr.mxu0 0.0
    %100 = vmatpush1.msra.mxu0 %v72
    %101 = vmatprep.subr.mxu0 0.0
    %102 = vmatpush1.msra.mxu0 %v73
    %103 = vmatprep.subr.mxu0 0.0
    %104 = vmatpush1.msra.mxu0 %v74
    %105 = vmatprep.subr.mxu0 0.0
    %106 = vmatpush1.msra.mxu0 %v75
    %107 = vmatprep.subr.mxu0 0.0
    %108 = vmatpush1.msra.mxu0 %v76
    %109 = vmatprep.subr.mxu0 0.0
    %110 = vmatpush1.msra.mxu0 %v77
    %111 = vmatprep.subr.mxu0 0.0
    %112 = vmatpush1.msra.mxu0 %v78
    %113 = vmatprep.subr.mxu0 0.0
    %114 = vmatpush1.msra.mxu0 %v79
    %115 = vmatprep.subr.mxu0 0.0
    %116 = vmatpush1.msra.mxu0 %v80
    %117 = vmatprep.subr.mxu0 0.0
    %118 = vmatpush1.msra.mxu0 %v81
    %119 = vmatprep.subr.mxu0 0.0
    %120 = vmatpush1.msra.mxu0 %v82
    %121 = vmatprep.subr.mxu0 0.0
    %122 = vmatpush1.msra.mxu0 %v83
    %123 = vmatprep.subr.mxu0 0.0
    %124 = vmatpush1.msra.mxu0 0.0
    %125 = vmatprep.subr.mxu0 0.0
    %126 = vmatpush1.msra.mxu0 0.0
    %127 = vmatprep.subr.mxu0 0.0
    %128 = vmatpush1.msra.mxu0 0.0
    %129 = vmatprep.subr.mxu0 0.0
    %130 = vmatpush1.msra.mxu0 0.0
    %131 = vmatprep.subr.mxu0 0.0
    %132 = vmatpush1.msra.mxu0 0.0
    %133 = vmatprep.subr.mxu0 0.0
    %134 = vmatpush1.msra.mxu0 0.0
    %135 = vmatprep.subr.mxu0 0.0
    %136 = vmatpush1.msra.mxu0 0.0
    %137 = vmatprep.subr.mxu0 0.0
    %138 = vmatpush1.msra.mxu0 0.0
    %139 = vmatprep.subr.mxu0 0.0
    %140 = vmatpush1.msra.mxu0 0.0
    %141 = vmatprep.subr.mxu0 0.0
    %142 = vmatpush1.msra.mxu0 0.0
    %143 = vmatprep.subr.mxu0 0.0
    %144 = vmatpush1.msra.mxu0 0.0
    %145 = vmatprep.subr.mxu0 0.0
    %146 = vmatpush1.msra.mxu0 0.0
    %147 = vmatprep.subr.mxu0 0.0
    %148 = vmatpush1.msra.mxu0 0.0
    %149 = vmatprep.subr.mxu0 0.0
    %150 = vmatpush1.msra.mxu0 0.0
    %151 = vmatprep.subr.mxu0 0.0
    %152 = vmatpush1.msra.mxu0 0.0
    %153 = vmatprep.subr.mxu0 0.0
    %154 = vmatpush1.msra.mxu0 0.0
    %155 = vmatprep.mubr.f32.mxu0 0.0
    %156 = vmatmul.mubr.f32.gmra.mrb[0].mxu0 %v67
    %v157 = vpop.f32.mrb[0].mxu0
    %v158 = vadd.f32 %v89, %v157
    %v159 = vpop.f32.mrb[0].mxu0
    %160 = vdwg.mxu0
    %v161 = vmax.f32 %v158, 0.0
    %v162 = vld [vmem:[#allocation4] sm:$0xff]
    %v163 = vld [vmem:[#allocation4 + $0x8] sm:$0xff]
    %v164 = vld [vmem:[#allocation4 + $0x10] sm:$0xff]
    %v165 = vld [vmem:[#allocation4 + $0x18] sm:$0xff]
    %v166 = vld [vmem:[#allocation4 + $0x20] sm:$0xff]
    %v167 = vld [vmem:[#allocation4 + $0x28] sm:$0xff]
    %v168 = vld [vmem:[#allocation4 + $0x30] sm:$0xff]
    %v169 = vld [vmem:[#allocation4 + $0x38] sm:$0xff]
    %v170 = vld [vmem:[#allocation4 + $0x40] sm:$0xff]
    %v171 = vld [vmem:[#allocation4 + $0x48] sm:$0xff]
    %v172 = vld [vmem:[#allocation4 + $0x50] sm:$0xff]
    %v173 = vld [vmem:[#allocation4 + $0x58] sm:$0xff]
    %v174 = vld [vmem:[#allocation4 + $0x60] sm:$0xff]
    %v175 = vld [vmem:[#allocation4 + $0x68] sm:$0xff]
    %v176 = vld [vmem:[#allocation4 + $0x70] sm:$0xff]
    %v177 = vld [vmem:[#allocation4 + $0x78] sm:$0xff]
    %v178 = vld [vmem:[%s4] sm:$0x1]
    %v180 = vlaneseq
    %v181 = vshrl.u32 %v180, 7
    %v182 = vsub.s32 0, %v181
    %v183 = vrot.slane %v178, %v182
    %185 = vmatprep.subr.mxu0 0.0
    %186 = vmatpush1.msra.mxu0 %v162
    %187 = vmatprep.subr.mxu0 0.0
    %188 = vmatpush1.msra.mxu0 %v163
    %189 = vmatprep.subr.mxu0 0.0
    %190 = vmatpush1.msra.mxu0 %v164
    %191 = vmatprep.subr.mxu0 0.0
    %192 = vmatpush1.msra.mxu0 %v165
    %193 = vmatprep.subr.mxu0 0.0
    %194 = vmatpush1.msra.mxu0 %v166
    %195 = vmatprep.subr.mxu0 0.0
    %196 = vmatpush1.msra.mxu0 %v167
    %197 = vmatprep.subr.mxu0 0.0
    %198 = vmatpush1.msra.mxu0 %v168
    %199 = vmatprep.subr.mxu0 0.0
    %200 = vmatpush1.msra.mxu0 %v169
    %201 = vmatprep.subr.mxu0 0.0
    %202 = vmatpush1.msra.mxu0 %v170
    %203 = vmatprep.subr.mxu0 0.0
    %204 = vmatpush1.msra.mxu0 %v171
    %205 = vmatprep.subr.mxu0 0.0
    %206 = vmatpush1.msra.mxu0 %v172
    %207 = vmatprep.subr.mxu0 0.0
    %208 = vmatpush1.msra.mxu0 %v173
    %209 = vmatprep.subr.mxu0 0.0
    %210 = vmatpush1.msra.mxu0 %v174
    %211 = vmatprep.subr.mxu0 0.0
    %212 = vmatpush1.msra.mxu0 %v175
    %213 = vmatprep.subr.mxu0 0.0
    %214 = vmatpush1.msra.mxu0 %v176
    %215 = vmatprep.subr.mxu0 0.0
    %216 = vmatpush1.msra.mxu0 %v177
    %217 = vmatprep.subr.mxu0 0.0
    %218 = vmatpush1.msra.mxu0 0.0
    %219 = vmatprep.subr.mxu0 0.0
    %220 = vmatpush1.msra.mxu0 0.0
    %221 = vmatprep.subr.mxu0 0.0
    %222 = vmatpush1.msra.mxu0 0.0
    %223 = vmatprep.subr.mxu0 0.0
    %224 = vmatpush1.msra.mxu0 0.0
    %225 = vmatprep.subr.mxu0 0.0
    %226 = vmatpush1.msra.mxu0 0.0
    %227 = vmatprep.subr.mxu0 0.0
    %228 = vmatpush1.msra.mxu0 0.0
    %229 = vmatprep.subr.mxu0 0.0
    %230 = vmatpush1.msra.mxu0 0.0
    %231 = vmatprep.subr.mxu0 0.0
    %232 = vmatpush1.msra.mxu0 0.0
    %233 = vmatprep.subr.mxu0 0.0
    %234 = vmatpush1.msra.mxu0 0.0
    %235 = vmatprep.subr.mxu0 0.0
    %236 = vmatpush1.msra.mxu0 0.0
    %237 = vmatprep.subr.mxu0 0.0
    %238 = vmatpush1.msra.mxu0 0.0
    %239 = vmatprep.subr.mxu0 0.0
    %240 = vmatpush1.msra.mxu0 0.0
    %241 = vmatprep.subr.mxu0 0.0
    %242 = vmatpush1.msra.mxu0 0.0
    %243 = vmatprep.subr.mxu0 0.0
    %244 = vmatpush1.msra.mxu0 0.0
    %245 = vmatprep.subr.mxu0 0.0
    %246 = vmatpush1.msra.mxu0 0.0
    %247 = vmatprep.subr.mxu0 0.0
    %248 = vmatpush1.msra.mxu0 0.0
    %249 = vmatprep.mubr.f32.mxu0 0.0
    %250 = vmatmul.mubr.f32.gmra.mrb[0].mxu0 %v161
    %v251 = vpop.f32.mrb[0].mxu0
    %v252 = vadd.f32 %v183, %v251
    %v253 = vpop.f32.mrb[0].mxu0
    %254 = vdwg.mxu0
    %v255 = vmax.f32 %v252, 0.0
    %v256 = vld [vmem:[#allocation6] sm:$0xff]
    %v257 = vld [vmem:[#allocation6 + $0x8] sm:$0xff]
    %v258 = vld [vmem:[#allocation6 + $0x10] sm:$0xff]
    %v259 = vld [vmem:[#allocation6 + $0x18] sm:$0xff]
    %v260 = vld [vmem:[#allocation6 + $0x20] sm:$0xff]
    %v261 = vld [vmem:[#allocation6 + $0x28] sm:$0xff]
    %v262 = vld [vmem:[#allocation6 + $0x30] sm:$0xff]
    %v263 = vld [vmem:[#allocation6 + $0x38] sm:$0xff]
    %v264 = vld [vmem:[#allocation6 + $0x40] sm:$0xff]
    %v265 = vld [vmem:[#allocation6 + $0x48] sm:$0xff]
    %v266 = vld [vmem:[#allocation6 + $0x50] sm:$0xff]
    %v267 = vld [vmem:[#allocation6 + $0x58] sm:$0xff]
    %v268 = vld [vmem:[#allocation6 + $0x60] sm:$0xff]
    %v269 = vld [vmem:[#allocation6 + $0x68] sm:$0xff]
    %v270 = vld [vmem:[#allocation6 + $0x70] sm:$0xff]
    %v271 = vld [vmem:[#allocation6 + $0x78] sm:$0xff]
    %v272 = vld [vmem:[%s6] sm:$0x1]
    %v274 = vlaneseq
    %v275 = vshrl.u32 %v274, 7
    %v276 = vsub.s32 0, %v275
    %v277 = vrot.slane %v272, %v276
    %279 = vmatprep.subr.mxu0 0.0
    %280 = vmatpush1.msra.mxu0 %v256
    %281 = vmatprep.subr.mxu0 0.0
    %282 = vmatpush1.msra.mxu0 %v257
    %283 = vmatprep.subr.mxu0 0.0
    %284 = vmatpush1.msra.mxu0 %v258
    %285 = vmatprep.subr.mxu0 0.0
    %286 = vmatpush1.msra.mxu0 %v259
    %287 = vmatprep.subr.mxu0 0.0
    %288 = vmatpush1.msra.mxu0 %v260
    %289 = vmatprep.subr.mxu0 0.0
    %290 = vmatpush1.msra.mxu0 %v261
    %291 = vmatprep.subr.mxu0 0.0
    %292 = vmatpush1.msra.mxu0 %v262
    %293 = vmatprep.subr.mxu0 0.0
    %294 = vmatpush1.msra.mxu0 %v263
    %295 = vmatprep.subr.mxu0 0.0
    %296 = vmatpush1.msra.mxu0 %v264
    %297 = vmatprep.subr.mxu0 0.0
    %298 = vmatpush1.msra.mxu0 %v265
    %299 = vmatprep.subr.mxu0 0.0
    %300 = vmatpush1.msra.mxu0 %v266
    %301 = vmatprep.subr.mxu0 0.0
    %302 = vmatpush1.msra.mxu0 %v267
    %303 = vmatprep.subr.mxu0 0.0
    %304 = vmatpush1.msra.mxu0 %v268
    %305 = vmatprep.subr.mxu0 0.0
    %306 = vmatpush1.msra.mxu0 %v269
    %307 = vmatprep.subr.mxu0 0.0
    %308 = vmatpush1.msra.mxu0 %v270
    %309 = vmatprep.subr.mxu0 0.0
    %310 = vmatpush1.msra.mxu0 %v271
    %311 = vmatprep.subr.mxu0 0.0
    %312 = vmatpush1.msra.mxu0 0.0
    %313 = vmatprep.subr.mxu0 0.0
    %314 = vmatpush1.msra.mxu0 0.0
    %315 = vmatprep.subr.mxu0 0.0
    %316 = vmatpush1.msra.mxu0 0.0
    %317 = vmatprep.subr.mxu0 0.0
    %318 = vmatpush1.msra.mxu0 0.0
    %319 = vmatprep.subr.mxu0 0.0
    %320 = vmatpush1.msra.mxu0 0.0
    %321 = vmatprep.subr.mxu0 0.0
    %322 = vmatpush1.msra.mxu0 0.0
    %323 = vmatprep.subr.mxu0 0.0
    %324 = vmatpush1.msra.mxu0 0.0
    %325 = vmatprep.subr.mxu0 0.0
    %326 = vmatpush1.msra.mxu0 0.0
    %327 = vmatprep.subr.mxu0 0.0
    %328 = vmatpush1.msra.mxu0 0.0
    %329 = vmatprep.subr.mxu0 0.0
    %330 = vmatpush1.msra.mxu0 0.0
    %331 = vmatprep.subr.mxu0 0.0
    %332 = vmatpush1.msra.mxu0 0.0
    %333 = vmatprep.subr.mxu0 0.0
    %334 = vmatpush1.msra.mxu0 0.0
    %335 = vmatprep.subr.mxu0 0.0
    %336 = vmatpush1.msra.mxu0 0.0
    %337 = vmatprep.subr.mxu0 0.0
    %338 = vmatpush1.msra.mxu0 0.0
    %339 = vmatprep.subr.mxu0 0.0
    %340 = vmatpush1.msra.mxu0 0.0
    %341 = vmatprep.subr.mxu0 0.0
    %342 = vmatpush1.msra.mxu0 0.0
    %343 = vmatprep.mubr.f32.mxu0 0.0
    %344 = vmatmul.mubr.f32.gmra.mrb[0].mxu0 %v255
    %v345 = vpop.f32.mrb[0].mxu0
    %v346 = vadd.f32 %v277, %v345
    %v347 = vpop.f32.mrb[0].mxu0
    %348 = vdwg.mxu0
    %349 = vst [vmem:[%s7] sm:$0xff] %v346
    // Predicated region
    $region42: #{mlp_forward_pallas.1} parent=1 // pred_check
      _
    $region43: #{mlp_forward_pallas.1} parent=1 // pred_check_branch
      %351 = sbr.rel (0) target = $region45
    $region44: #{mlp_forward_pallas.1} parent=1 // pred_region
      _
    $region45: #{mlp_forward_pallas.1} parent=1 // pred_fallthru
      _
    // Predicated region
    $region46: #{mlp_forward_pallas.1} parent=1 // pred_check
      _
    $region47: #{mlp_forward_pallas.1} parent=1 // pred_check_branch
      %353 = sbr.rel (0) target = $region49
    $region48: #{mlp_forward_pallas.1} parent=1 // pred_region
      _
    $region49: #{mlp_forward_pallas.1} parent=1 // pred_fallthru
      _
    %354 = vsyncpa [#allocation3], 1
    %355 = vsyncpa [#allocation5], 1

</llo_original>
